<compile_context>
chip_gen: v6e
topology: v6e:2x2x1
jax: 0.10.0
libtpu: 0.0.40
codegen_flags: <defaults>
</compile_context>

<pallas_src>
import numpy as np
import jax
import jax.numpy as jnp
from jax.experimental import pallas as pl
from jax.experimental.pallas import tpu as pltpu
from jax.scipy.linalg import block_diag

# ----------------------------- configuration -------------------------------
BATCH = 8
FEATURE_NUM = 32
FIELD_NUM = 4
LATENT_DIM = 8
DNN_DIM = FIELD_NUM * LATENT_DIM            # 32
MLP_DIMS = (32, 32)
CROSS_NUM = 2
PACK = 4 * DNN_DIM                          # 128-lane packed width

MASK_WEIGHT_INIT = 0.0
MASK_SCALING = 1.0
INIT_THRE = 0.5
TEMP = 1.0

# scaling = mask_scaling * (1 / sigmoid(mask_weight_init_value))
SCALING = float(MASK_SCALING * (1.0 / (1.0 / (1.0 + np.exp(-MASK_WEIGHT_INIT)))))
THRE = float(INIT_THRE * MASK_SCALING)      # self.thre parameter (scalar)


# --------------------------- fused Pallas kernel ----------------------------
def make_fused_kernel(cross_num, n_mlp, dnn_dim, scaling, temp, thre):
    D = dnn_dim

    def kernel(x_ref, w_ref, b_ref, comb_ref, out_ref):
        x = x_ref[...]                                     # (tb, 4D): [embed|mw_i|mw_s|mw_j]
        e = x[:, :D]

        # masks: one 96-lane EUP sigmoid (instead of 3 quarter-occupancy ones)
        m = scaling * jax.nn.sigmoid(temp * x[:, D:])      # (tb, 3D)
        mi, ms, mj = m[:, :D], m[:, D:2 * D], m[:, 2 * D:]
        gate = ms > thre                                   # == sign(relu(ms - thre))
        xs = e * ms
        # 128-lane packed input: [x_dnn0 | x_dnn1 | x_dnns | x_dnns]
        xin = jnp.concatenate(
            [e * jnp.where(gate, ms, mi), e * jnp.where(gate, ms, mj), xs, xs], axis=1)

        # CrossNetwork: x_{l+1} = x0 * (x_l . w_l) + b_l + x_l
        # Both branches + shared rows fused: W[i] is block-diagonal with rank-1
        # "broadcast-matvec" blocks, so one MXU matmul yields the per-block scalar
        # already broadcast across that block's 32 lanes.
        xc = xin
        for i in range(cross_num):
            xw = jnp.dot(xc, w_ref[i], preferred_element_type=jnp.float32)
            xc = xin * xw + b_ref[i] + xc

        # MLP (Linear -> ReLU; eval mode: no dropout / BN), block-diagonal (4D,4D) weights
        h = xin
        for li in range(n_mlp):
            h = jnp.maximum(
                jnp.dot(h, w_ref[cross_num + li], preferred_element_type=jnp.float32)
                + b_ref[cross_num + li], 0.0)

        # Combination Linear (no bias) for all four logits at once.
        # comb_ref[0] applies to the cross output, comb_ref[1] to the MLP output;
        # only the first 4 columns are non-zero (zero-padded to a full MXU width).
        logits = (jnp.dot(xc, comb_ref[0], preferred_element_type=jnp.float32)
                  + jnp.dot(h, comb_ref[1], preferred_element_type=jnp.float32))
        out_ref[...] = logits[:, :4]                       # [logit0, logit1, logit0s, logit1s]

    return kernel


# --------------------------- weight packing (wrapper) ------------------------
def pack_params(branch0, branch1):
    """Pack both branches' weights into block-diagonal 128-wide slabs.

    Lane blocks: [x_dnn0(branch0) | x_dnn1(branch1) | x_dnns(branch0) | x_dnns(branch1)].
    """
    cw0, cb0, ws0, bs0, comb0 = branch0
    cw1, cb1, ws1, bs1, comb1 = branch1
    D = DNN_DIM

    W_list, b_list = [], []
    # cross layers: rank-1 blocks broadcast_to(w[:,None]) so (xc @ W) == (xc . w) per block
    for i in range(CROSS_NUM):
        m0 = jnp.broadcast_to(cw0[i][:, None], (D, D))
        m1 = jnp.broadcast_to(cw1[i][:, None], (D, D))
        W_list.append(block_diag(m0, m1, m0, m1))
        b_list.append(jnp.concatenate([cb0[i], cb1[i], cb0[i], cb1[i]]))
    # MLP layers: true block-diagonal weights
    for w0, w1, bia0, bia1 in zip(ws0, ws1, bs0, bs1):
        assert w0.shape == (D, D) and w1.shape == (D, D), \
            "packed layout assumes mlp_dims[i] == dnn_dim"  # TODO(synk): general dims
        W_list.append(block_diag(w0, w1, w0, w1))
        b_list.append(jnp.concatenate([bia0[0], bia1[0], bia0[0], bia1[0]]))

    W = jnp.stack(W_list).astype(jnp.float32)              # (cross+mlp, 4D, 4D)
    b = jnp.stack(b_list).astype(jnp.float32)[:, None, :]  # (cross+mlp, 1, 4D)

    def place(vec, blk):
        return jnp.zeros((PACK,), jnp.float32).at[blk * D:(blk + 1) * D].set(vec)

    # output column j -> [logit0, logit1, logit0s, logit1s]
    cross_parts = [comb0[0, :D], comb1[0, :D], comb0[0, :D], comb1[0, :D]]
    mlp_parts = [comb0[0, D:], comb1[0, D:], comb0[0, D:], comb1[0, D:]]
    wc = jnp.stack([place(v, j) for j, v in enumerate(cross_parts)], axis=1)  # (4D, 4)
    wh = jnp.stack([place(v, j) for j, v in enumerate(mlp_parts)], axis=1)    # (4D, 4)
    pad = jnp.zeros((PACK, PACK - 4), jnp.float32)
    comb = jnp.stack([jnp.concatenate([wc, pad], axis=1),
                      jnp.concatenate([wh, pad], axis=1)])                    # (2, 4D, 4D)
    return W, b, comb


# ------------------------------- forward ------------------------------------
def mask_deep_cross_forward(x_idx, params, *, batch_tile=2048):
    embedding, mw_i, mw_s, mw_j, branch0, branch1 = params
    batch = x_idx.shape[0]
    assert batch_tile % 8 == 0

    # -------- plain-JAX glue: gathers packed into ONE lane-dense (B, 128) slab --------
    embed = jnp.take(embedding, x_idx, axis=0).reshape(batch, DNN_DIM)

    def bcast(mw):  # (feature_num, 1) -> gathered & broadcast to (B, D)
        g = jnp.take(mw[:, 0], x_idx, axis=0)                               # (B, F)
        return jnp.broadcast_to(
            g[:, :, None], (batch, FIELD_NUM, LATENT_DIM)).reshape(batch, DNN_DIM)

    packed = jnp.concatenate([embed, bcast(mw_i), bcast(mw_s), bcast(mw_j)],
                             axis=1).astype(jnp.float32)                    # (B, 128)

    # -------- batch tiling: sublane-aligned padding; prefer >=2 tiles (v7x dual-TC) ----
    pad8 = -(-batch // 8) * 8
    if pad8 > batch_tile:
        tb = batch_tile
    else:
        tb = max(8, (pad8 // 2) // 8 * 8)
    padded = -(-pad8 // tb) * tb
    n_tiles = padded // tb
    if padded != batch:
        packed = jnp.pad(packed, ((0, padded - batch), (0, 0)))

    W, b, comb = pack_params(branch0, branch1)
    n_lay = W.shape[0]
    kernel = make_fused_kernel(CROSS_NUM, len(MLP_DIMS), DNN_DIM, SCALING, TEMP, THRE)

    in_specs = [
        pl.BlockSpec((tb, PACK), lambda i: (i, 0)),
        pl.BlockSpec((n_lay, PACK, PACK), lambda i: (0, 0, 0)),
        pl.BlockSpec((n_lay, 1, PACK), lambda i: (0, 0, 0)),
        pl.BlockSpec((2, PACK, PACK), lambda i: (0, 0, 0)),
    ]

    # advisory cost estimate so XLA schedules gathers/reshapes around the call
    cost = pl.CostEstimate(
        flops=int(padded * (n_lay + 2) * 2 * PACK * PACK),
        transcendentals=int(padded * 3 * DNN_DIM),
        bytes_accessed=int(4 * (padded * PACK + W.size + b.size + comb.size + padded * 4)),
    )

    logits = pl.pallas_call(
        kernel,
        grid=(n_tiles,),
        in_specs=in_specs,
        out_specs=pl.BlockSpec((tb, 4), lambda i: (i, 0)),
        out_shape=jax.ShapeDtypeStruct((padded, 4), jnp.float32),
        compiler_params=pltpu.CompilerParams(dimension_semantics=("parallel",)),
        cost_estimate=cost,
    )(packed, W, b, comb)

    logits = logits[:batch]
    # (logit0, logit1, logit0s, logit1s) — same tuple layout as the PyTorch module
    return (logits[:, 0:1], logits[:, 1:2], logits[:, 2:3], logits[:, 3:4])


# ------------------------------ parameters ----------------------------------
def init_params(key):
    keys = jax.random.split(key, 8)
    # MaskEmbedding.embedding: xavier_uniform over (feature_num, latent_dim)
    bound = float(np.sqrt(6.0 / (FEATURE_NUM + LATENT_DIM)))
    embedding = jax.random.uniform(keys[0], (FEATURE_NUM, LATENT_DIM),
                                   jnp.float32, -bound, bound)
    # module inits mask weights to a constant; add deterministic noise (and shift
    # mask_weight_s) so BOTH gate branches (ms > thre and ms <= thre) are exercised.
    mw_i = MASK_WEIGHT_INIT + 0.3 * jax.random.normal(keys[1], (FEATURE_NUM, 1), jnp.float32)
    mw_s = (MASK_WEIGHT_INIT - 1.1) + 1.5 * jax.random.normal(keys[2], (FEATURE_NUM, 1), jnp.float32)
    mw_j = MASK_WEIGHT_INIT + 0.3 * jax.random.normal(keys[3], (FEATURE_NUM, 1), jnp.float32)

    def init_branch(bkey):
        n_mlp = len(MLP_DIMS)
        ks = jax.random.split(bkey, 2 + 2 * n_mlp)
        cross_w = 0.1 * jax.random.normal(ks[0], (CROSS_NUM, DNN_DIM), jnp.float32)
        cross_b = jnp.zeros((CROSS_NUM, DNN_DIM), jnp.float32)
        mlp_ws, mlp_bs = [], []
        in_dim = DNN_DIM
        for li, hdim in enumerate(MLP_DIMS):
            mlp_ws.append(0.1 * jax.random.normal(ks[1 + 2 * li], (in_dim, hdim), jnp.float32))
            mlp_bs.append(0.01 * jax.random.normal(ks[2 + 2 * li], (1, hdim), jnp.float32))
            in_dim = hdim
        comb_w = 0.1 * jax.random.normal(ks[-1], (1, DNN_DIM + MLP_DIMS[-1]), jnp.float32)
        return (cross_w, cross_b, mlp_ws, mlp_bs, comb_w)

    return embedding, mw_i, mw_s, mw_j, init_branch(keys[4]), init_branch(keys[5])


# --------------------------- pure-JAX reference ------------------------------
def _ref_branch(x, cross_w, cross_b, mlp_ws, mlp_bs, comb_w):
    hp = jax.lax.Precision.HIGHEST
    x0, xc = x, x
    for i in range(CROSS_NUM):
        xw = jnp.dot(xc, cross_w[i][:, None], precision=hp)
        xc = x0 * xw + cross_b[i:i + 1, :] + xc
    h = x
    for w, bia in zip(mlp_ws, mlp_bs):
        h = jnp.maximum(jnp.dot(h, w, precision=hp) + bia, 0.0)
    comb = jnp.concatenate([xc, h], axis=1)
    return jnp.dot(comb, comb_w[0][:, None], precision=hp)


def _ref_forward(x_idx, params):
    embedding, mw_i, mw_s, mw_j, branch0, branch1 = params
    batch = x_idx.shape[0]
    embed = jnp.take(embedding, x_idx, axis=0)                 # (B, F, L)
    mi = SCALING * jax.nn.sigmoid(TEMP * jnp.take(mw_i, x_idx, axis=0))
    ms = SCALING * jax.nn.sigmoid(TEMP * jnp.take(mw_s, x_idx, axis=0))
    mj = SCALING * jax.nn.sigmoid(TEMP * jnp.take(mw_j, x_idx, axis=0))
    g = jnp.sign(jnp.maximum(ms - THRE, 0.0))                  # original gate form
    m1 = ms * g + mi * (1.0 - g)
    m2 = ms * g + mj * (1.0 - g)
    x_dnns = (embed * ms).reshape(batch, DNN_DIM)
    x_dnn0 = (embed * m1).reshape(batch, DNN_DIM)
    x_dnn1 = (embed * m2).reshape(batch, DNN_DIM)
    return (_ref_branch(x_dnn0, *branch0), _ref_branch(x_dnn1, *branch1),
            _ref_branch(x_dnns, *branch0), _ref_branch(x_dnns, *branch1))


# --------------------------------- main --------------------------------------
if __name__ == "__main__":
    key = jax.random.PRNGKey(0)
    kparams, kx = jax.random.split(key)
    params = init_params(kparams)
    x = jax.random.randint(kx, (BATCH, FIELD_NUM), 0, FEATURE_NUM, dtype=jnp.int32)

    outs = jax.block_until_ready(mask_deep_cross_forward(x, params))
    refs = jax.block_until_ready(_ref_forward(x, params))
    for o, r in zip(outs, refs):
        assert o.shape == (BATCH, 1)
        np.testing.assert_allclose(np.asarray(o), np.asarray(r), rtol=1e-4, atol=1e-4)

    print("KERNEL_OK")
</pallas_src>

<mosaic_0001>
module attributes {stable_mosaic.version = 11 : i64} {
  func.func @kernel(%arg0: i32, %arg1: memref<8x128xf32, #tpu.memory_space<vmem>>, %arg2: memref<4x128x128xf32, #tpu.memory_space<vmem>>, %arg3: memref<4x1x128xf32, #tpu.memory_space<vmem>>, %arg4: memref<2x128x128xf32, #tpu.memory_space<vmem>>, %arg5: memref<8x4xf32, #tpu.memory_space<vmem>>) attributes {dimension_semantics = [#tpu.dimension_semantics<parallel>], iteration_bounds = array<i64: 1>, scalar_prefetch = 0 : i64, scratch_operands = 0 : i64, tpu.core_type = #tpu.core_type<tc>, window_params = [{transform_indices = @transform_0, window_bounds = array<i64: 8, 128>}, {pipeline_mode = #tpu.pipeline_mode<synchronous>, transform_indices = @transform_1, window_bounds = array<i64: 4, 128, 128>}, {pipeline_mode = #tpu.pipeline_mode<synchronous>, transform_indices = @transform_2, window_bounds = array<i64: 4, 1, 128>}, {pipeline_mode = #tpu.pipeline_mode<synchronous>, transform_indices = @transform_3, window_bounds = array<i64: 2, 128, 128>}, {transform_indices = @transform_4, window_bounds = array<i64: 8, 4>}]} {
    %c0 = arith.constant 0 : index
    %c0_0 = arith.constant 0 : index
    %0 = vector.load %arg1[%c0, %c0_0] : memref<8x128xf32, #tpu.memory_space<vmem>>, vector<8x128xf32>
    %1 = vector.extract_strided_slice %0 {offsets = [0, 0], sizes = [8, 32], strides = [1, 1]} : vector<8x128xf32> to vector<8x32xf32>
    %2 = vector.extract_strided_slice %0 {offsets = [0, 32], sizes = [8, 96], strides = [1, 1]} : vector<8x128xf32> to vector<8x96xf32>
    %cst = arith.constant 1.000000e+00 : f32
    %3 = vector.broadcast %cst : f32 to vector<8x96xf32>
    %4 = arith.mulf %3, %2 : vector<8x96xf32>
    %5 = arith.negf %4 : vector<8x96xf32>
    %6 = math.exp %5 : vector<8x96xf32>
    %cst_1 = arith.constant 1.000000e+00 : f32
    %7 = vector.broadcast %cst_1 : f32 to vector<8x96xf32>
    %8 = arith.addf %7, %6 : vector<8x96xf32>
    %9 = arith.divf %7, %8 : vector<8x96xf32>
    %cst_2 = arith.constant 2.000000e+00 : f32
    %10 = vector.broadcast %cst_2 : f32 to vector<8x96xf32>
    %11 = arith.mulf %10, %9 : vector<8x96xf32>
    %12 = vector.extract_strided_slice %11 {offsets = [0, 0], sizes = [8, 32], strides = [1, 1]} : vector<8x96xf32> to vector<8x32xf32>
    %13 = vector.extract_strided_slice %11 {offsets = [0, 32], sizes = [8, 32], strides = [1, 1]} : vector<8x96xf32> to vector<8x32xf32>
    %14 = vector.extract_strided_slice %11 {offsets = [0, 64], sizes = [8, 32], strides = [1, 1]} : vector<8x96xf32> to vector<8x32xf32>
    %cst_3 = arith.constant 5.000000e-01 : f32
    %15 = vector.broadcast %cst_3 : f32 to vector<8x32xf32>
    %16 = arith.cmpf ogt, %13, %15 : vector<8x32xf32>
    %17 = arith.mulf %1, %13 : vector<8x32xf32>
    %18 = arith.select %16, %13, %12 : vector<8x32xi1>, vector<8x32xf32>
    %19 = arith.mulf %1, %18 : vector<8x32xf32>
    %20 = arith.select %16, %13, %14 : vector<8x32xi1>, vector<8x32xf32>
    %21 = arith.mulf %1, %20 : vector<8x32xf32>
    %22 = tpu.concatenate %19, %21, %17, %17 in 1 : vector<8x32xf32>, vector<8x32xf32>, vector<8x32xf32>, vector<8x32xf32> -> vector<8x128xf32>
    %c0_4 = arith.constant 0 : index
    %c0_5 = arith.constant 0 : index
    %c0_6 = arith.constant 0 : index
    %23 = vector.load %arg2[%c0_4, %c0_5, %c0_6] : memref<4x128x128xf32, #tpu.memory_space<vmem>>, vector<1x128x128xf32>
    %24 = vector.shape_cast %23 : vector<1x128x128xf32> to vector<128x128xf32>
    %cst_7 = arith.constant dense<0.000000e+00> : vector<8x128xf32>
    %25 = tpu.matmul %22, %24, %cst_7 {dimension_numbers = #tpu.dot_dimension_numbers<[1], [0], [0], [1], [0, 0, 1, 1], [], []>} : vector<8x128xf32>, vector<128x128xf32>, vector<8x128xf32> -> vector<8x128xf32>
    %26 = arith.mulf %22, %25 : vector<8x128xf32>
    %c0_8 = arith.constant 0 : index
    %c0_9 = arith.constant 0 : index
    %c0_10 = arith.constant 0 : index
    %27 = vector.load %arg3[%c0_8, %c0_9, %c0_10] : memref<4x1x128xf32, #tpu.memory_space<vmem>>, vector<1x1x128xf32>
    %28 = vector.shape_cast %27 : vector<1x1x128xf32> to vector<1x128xf32>
    %29 = vector.broadcast %28 : vector<1x128xf32> to vector<8x128xf32>
    %30 = arith.addf %26, %29 : vector<8x128xf32>
    %31 = arith.addf %30, %22 : vector<8x128xf32>
    %c1 = arith.constant 1 : index
    %c0_11 = arith.constant 0 : index
    %c0_12 = arith.constant 0 : index
    %32 = vector.load %arg2[%c1, %c0_11, %c0_12] : memref<4x128x128xf32, #tpu.memory_space<vmem>>, vector<1x128x128xf32>
    %33 = vector.shape_cast %32 : vector<1x128x128xf32> to vector<128x128xf32>
    %cst_13 = arith.constant dense<0.000000e+00> : vector<8x128xf32>
    %34 = tpu.matmul %31, %33, %cst_13 {dimension_numbers = #tpu.dot_dimension_numbers<[1], [0], [0], [1], [0, 0, 1, 1], [], []>} : vector<8x128xf32>, vector<128x128xf32>, vector<8x128xf32> -> vector<8x128xf32>
    %35 = arith.mulf %22, %34 : vector<8x128xf32>
    %c1_14 = arith.constant 1 : index
    %c0_15 = arith.constant 0 : index
    %c0_16 = arith.constant 0 : index
    %36 = vector.load %arg3[%c1_14, %c0_15, %c0_16] : memref<4x1x128xf32, #tpu.memory_space<vmem>>, vector<1x1x128xf32>
    %37 = vector.shape_cast %36 : vector<1x1x128xf32> to vector<1x128xf32>
    %38 = vector.broadcast %37 : vector<1x128xf32> to vector<8x128xf32>
    %39 = arith.addf %35, %38 : vector<8x128xf32>
    %40 = arith.addf %39, %31 : vector<8x128xf32>
    %c2 = arith.constant 2 : index
    %c0_17 = arith.constant 0 : index
    %c0_18 = arith.constant 0 : index
    %41 = vector.load %arg2[%c2, %c0_17, %c0_18] : memref<4x128x128xf32, #tpu.memory_space<vmem>>, vector<1x128x128xf32>
    %42 = vector.shape_cast %41 : vector<1x128x128xf32> to vector<128x128xf32>
    %cst_19 = arith.constant dense<0.000000e+00> : vector<8x128xf32>
    %43 = tpu.matmul %22, %42, %cst_19 {dimension_numbers = #tpu.dot_dimension_numbers<[1], [0], [0], [1], [0, 0, 1, 1], [], []>} : vector<8x128xf32>, vector<128x128xf32>, vector<8x128xf32> -> vector<8x128xf32>
    %c2_20 = arith.constant 2 : index
    %c0_21 = arith.constant 0 : index
    %c0_22 = arith.constant 0 : index
    %44 = vector.load %arg3[%c2_20, %c0_21, %c0_22] : memref<4x1x128xf32, #tpu.memory_space<vmem>>, vector<1x1x128xf32>
    %45 = vector.shape_cast %44 : vector<1x1x128xf32> to vector<1x128xf32>
    %46 = vector.broadcast %45 : vector<1x128xf32> to vector<8x128xf32>
    %47 = arith.addf %43, %46 : vector<8x128xf32>
    %cst_23 = arith.constant 0.000000e+00 : f32
    %48 = vector.broadcast %cst_23 : f32 to vector<8x128xf32>
    %49 = arith.maximumf %47, %48 : vector<8x128xf32>
    %c3 = arith.constant 3 : index
    %c0_24 = arith.constant 0 : index
    %c0_25 = arith.constant 0 : index
    %50 = vector.load %arg2[%c3, %c0_24, %c0_25] : memref<4x128x128xf32, #tpu.memory_space<vmem>>, vector<1x128x128xf32>
    %51 = vector.shape_cast %50 : vector<1x128x128xf32> to vector<128x128xf32>
    %cst_26 = arith.constant dense<0.000000e+00> : vector<8x128xf32>
    %52 = tpu.matmul %49, %51, %cst_26 {dimension_numbers = #tpu.dot_dimension_numbers<[1], [0], [0], [1], [0, 0, 1, 1], [], []>} : vector<8x128xf32>, vector<128x128xf32>, vector<8x128xf32> -> vector<8x128xf32>
    %c3_27 = arith.constant 3 : index
    %c0_28 = arith.constant 0 : index
    %c0_29 = arith.constant 0 : index
    %53 = vector.load %arg3[%c3_27, %c0_28, %c0_29] : memref<4x1x128xf32, #tpu.memory_space<vmem>>, vector<1x1x128xf32>
    %54 = vector.shape_cast %53 : vector<1x1x128xf32> to vector<1x128xf32>
    %55 = vector.broadcast %54 : vector<1x128xf32> to vector<8x128xf32>
    %56 = arith.addf %52, %55 : vector<8x128xf32>
    %cst_30 = arith.constant 0.000000e+00 : f32
    %57 = vector.broadcast %cst_30 : f32 to vector<8x128xf32>
    %58 = arith.maximumf %56, %57 : vector<8x128xf32>
    %c0_31 = arith.constant 0 : index
    %c0_32 = arith.constant 0 : index
    %c0_33 = arith.constant 0 : index
    %59 = vector.load %arg4[%c0_31, %c0_32, %c0_33] : memref<2x128x128xf32, #tpu.memory_space<vmem>>, vector<1x128x128xf32>
    %60 = vector.shape_cast %59 : vector<1x128x128xf32> to vector<128x128xf32>
    %cst_34 = arith.constant dense<0.000000e+00> : vector<8x128xf32>
    %61 = tpu.matmul %40, %60, %cst_34 {dimension_numbers = #tpu.dot_dimension_numbers<[1], [0], [0], [1], [0, 0, 1, 1], [], []>} : vector<8x128xf32>, vector<128x128xf32>, vector<8x128xf32> -> vector<8x128xf32>
    %c1_35 = arith.constant 1 : index
    %c0_36 = arith.constant 0 : index
    %c0_37 = arith.constant 0 : index
    %62 = vector.load %arg4[%c1_35, %c0_36, %c0_37] : memref<2x128x128xf32, #tpu.memory_space<vmem>>, vector<1x128x128xf32>
    %63 = vector.shape_cast %62 : vector<1x128x128xf32> to vector<128x128xf32>
    %cst_38 = arith.constant dense<0.000000e+00> : vector<8x128xf32>
    %64 = tpu.matmul %58, %63, %cst_38 {dimension_numbers = #tpu.dot_dimension_numbers<[1], [0], [0], [1], [0, 0, 1, 1], [], []>} : vector<8x128xf32>, vector<128x128xf32>, vector<8x128xf32> -> vector<8x128xf32>
    %65 = arith.addf %61, %64 : vector<8x128xf32>
    %66 = vector.extract_strided_slice %65 {offsets = [0, 0], sizes = [8, 4], strides = [1, 1]} : vector<8x128xf32> to vector<8x4xf32>
    %c0_39 = arith.constant 0 : index
    %c0_40 = arith.constant 0 : index
    %67 = vector.load %arg5[%c0_39, %c0_40] : memref<8x4xf32, #tpu.memory_space<vmem>>, vector<8x4xf32>
    tpu.vector_store %arg5[%c0_39, %c0_40], %66 {strides = array<i32>} : memref<8x4xf32, #tpu.memory_space<vmem>>, vector<8x4xf32>,
    return
  }
  func.func @transform_0(%arg0: i32) -> (i32, i32) {
    %c0_i32 = arith.constant 0 : i32
    %c0_i32_0 = arith.constant 0 : i32
    return %arg0, %c0_i32 : i32, i32
  }
  func.func @transform_1(%arg0: i32) -> (i32, i32, i32) {
    %c0_i32 = arith.constant 0 : i32
    %c0_i32_0 = arith.constant 0 : i32
    %c0_i32_1 = arith.constant 0 : i32
    %c0_i32_2 = arith.constant 0 : i32
    return %c0_i32, %c0_i32_0, %c0_i32_1 : i32, i32, i32
  }
  func.func @transform_2(%arg0: i32) -> (i32, i32, i32) {
    %c0_i32 = arith.constant 0 : i32
    %c0_i32_0 = arith.constant 0 : i32
    %c0_i32_1 = arith.constant 0 : i32
    %c0_i32_2 = arith.constant 0 : i32
    return %c0_i32, %c0_i32_0, %c0_i32_1 : i32, i32, i32
  }
  func.func @transform_3(%arg0: i32) -> (i32, i32, i32) {
    %c0_i32 = arith.constant 0 : i32
    %c0_i32_0 = arith.constant 0 : i32
    %c0_i32_1 = arith.constant 0 : i32
    %c0_i32_2 = arith.constant 0 : i32
    return %c0_i32, %c0_i32_0, %c0_i32_1 : i32, i32, i32
  }
  func.func @transform_4(%arg0: i32) -> (i32, i32) {
    %c0_i32 = arith.constant 0 : i32
    %c0_i32_0 = arith.constant 0 : i32
    return %arg0, %c0_i32 : i32, i32
  }
}

</mosaic_0001>

<llo_original>
// kernel: tpu_custom_call.1
$region0: #{tpu_custom_call.1}
  #allocation0 [shape = 'u32[]', space=smem, size = 0x4, offset = 0x4, fixed_abs, tag = 'smem constant byte address 0x4 - core index']
  #allocation1 [shape = 'u32[144,128]{1,0:T(1,128)}', space=vmem, size = 0x12000, scoped, tag = 'internal scratch']
  %s0 = inlined_call_operand.hbm [shape: f32[8,128], index: 0, kind: input, shape index: {}]
  %s1 = inlined_call_operand.hbm [shape: f32[4,128,128], index: 1, kind: input, shape index: {}]
  %s2 = inlined_call_operand.hbm [shape: f32[4,1,128], index: 2, kind: input, shape index: {}]
  %s3 = inlined_call_operand.hbm [shape: f32[2,128,128], index: 3, kind: input, shape index: {}]
  %s4 = inlined_call_operand.vmem [shape: f32[8,4], index: 4, kind: output, shape index: {}]
  %s5 = sld [smem:[#allocation0]]
  $region42: #{tpu_custom_call.1} parent=0
    _
  %s7 = ssub.s32 1, %s5
  %s8 = scalar_select 0, %s7, %s5
  $region1: #{tpu_custom_call.1} parent=0
    #allocation2 [shape = 'u8[4096]{0}', space=vmem, size = 0x1000, scoped, tag = 'input window, operand 0, single buffered']
    #allocation3 [shape = 's32[1]{0}', space=sflag, size = 0x4, scoped, tag = 'scoped memory for tpu_custom_call.1']
    #allocation4 [shape = 'u8[262144]{0}', space=vmem, size = 0x40000, scoped, tag = 'input window, operand 1, single buffered']
    #allocation5 [shape = 's32[1]{0}', space=sflag, size = 0x4, scoped, tag = 'scoped memory for tpu_custom_call.1']
    #allocation6 [shape = 'u8[2048]{0}', space=vmem, size = 0x800, scoped, tag = 'input window, operand 2, single buffered']
    #allocation7 [shape = 'u8[131072]{0}', space=vmem, size = 0x20000, scoped, tag = 'input window, operand 3, single buffered']
    #allocation8 [shape = 's32[1]{0}', space=sflag, size = 0x4, scoped, tag = 'scoped memory for tpu_custom_call.1']
    %9 = vsyncpa [#allocation3], 0
    %10 = vsyncpa [#allocation5], 0
    %11 = vsyncpa [#allocation8], 0
    // Predicated region
    $region2: #{tpu_custom_call.1} parent=1 // pred_check
      _
    $region3: #{tpu_custom_call.1} parent=1 // pred_check_branch
      %13 = sbr.rel (0) target = $region5
    $region4: #{tpu_custom_call.1} parent=1 // pred_region
      %s15 = ssub.s32 128, 128
      %16 = vsyncadd [#allocation3], %s15
      %s18 = sshll.u32 [#allocation2], 4
      %s19 = int_to_ptr.vmem [resolvable:$true] %s18
      %21 = dma.hbm_to_vmem [thread:$0]  %s0, 128, %s19, [#allocation3]
    $region5: #{tpu_custom_call.1} parent=1 // pred_fallthru
      _
    // Predicated region
    $region6: #{tpu_custom_call.1} parent=1 // pred_check
      _
    $region7: #{tpu_custom_call.1} parent=1 // pred_check_branch
      %23 = sbr.rel (0) target = $region9
    $region8: #{tpu_custom_call.1} parent=1 // pred_region
      %s25 = ssub.s32 8192, 8192
      %26 = vsyncadd [#allocation5], %s25
      %s27 = sshll.u32 [#allocation4], 4
      %s28 = int_to_ptr.vmem [resolvable:$true] %s27
      %33 = dma.hbm_to_vmem [thread:$0]  %s1, 8192, %s28, [#allocation5], 128, 128, 8
    $region9: #{tpu_custom_call.1} parent=1 // pred_fallthru
      _
    // Predicated region
    $region10: #{tpu_custom_call.1} parent=1 // pred_check
      _
    $region11: #{tpu_custom_call.1} parent=1 // pred_check_branch
      %35 = sbr.rel (0) target = $region13
    $region12: #{tpu_custom_call.1} parent=1 // pred_region
      %s37 = ssub.s32 64, 64
      %38 = vsyncadd [#allocation5], %s37
      %s39 = sshll.u32 [#allocation6], 4
      %s40 = int_to_ptr.vmem [resolvable:$true] %s39
      %45 = dma.hbm_to_vmem [thread:$0]  %s2, 64, %s40, [#allocation5], 16, 16, 1
    $region13: #{tpu_custom_call.1} parent=1 // pred_fallthru
      _
    // Predicated region
    $region14: #{tpu_custom_call.1} parent=1 // pred_check
      _
    $region15: #{tpu_custom_call.1} parent=1 // pred_check_branch
      %47 = sbr.rel (0) target = $region17
    $region16: #{tpu_custom_call.1} parent=1 // pred_region
      %s49 = ssub.s32 4096, 4096
      %50 = vsyncadd [#allocation8], %s49
      %s51 = sshll.u32 [#allocation7], 4
      %s52 = int_to_ptr.vmem [resolvable:$true] %s51
      %57 = dma.hbm_to_vmem [thread:$0]  %s3, 4096, %s52, [#allocation8], 128, 128, 8
    $region17: #{tpu_custom_call.1} parent=1 // pred_fallthru
      _
    // Predicated region
    $region18: #{tpu_custom_call.1} parent=1 // pred_check
      _
    $region19: #{tpu_custom_call.1} parent=1 // pred_check_branch
      %59 = sbr.rel (0) target = $region21
    $region20: #{tpu_custom_call.1} parent=1 // pred_region
      %60 = dma.done [#allocation3], 128
    $region21: #{tpu_custom_call.1} parent=1 // pred_fallthru
      _
    // Predicated region
    $region22: #{tpu_custom_call.1} parent=1 // pred_check
      _
    $region23: #{tpu_custom_call.1} parent=1 // pred_check_branch
      %62 = sbr.rel (0) target = $region25
    $region24: #{tpu_custom_call.1} parent=1 // pred_region
      %63 = dma.done [#allocation5], 8192
    $region25: #{tpu_custom_call.1} parent=1 // pred_fallthru
      _
    // Predicated region
    $region26: #{tpu_custom_call.1} parent=1 // pred_check
      _
    $region27: #{tpu_custom_call.1} parent=1 // pred_check_branch
      %65 = sbr.rel (0) target = $region29
    $region28: #{tpu_custom_call.1} parent=1 // pred_region
      %66 = dma.done [#allocation5], 64
    $region29: #{tpu_custom_call.1} parent=1 // pred_fallthru
      _
    // Predicated region
    $region30: #{tpu_custom_call.1} parent=1 // pred_check
      _
    $region31: #{tpu_custom_call.1} parent=1 // pred_check_branch
      %68 = sbr.rel (0) target = $region33
    $region32: #{tpu_custom_call.1} parent=1 // pred_region
      %69 = dma.done [#allocation8], 4096
    $region33: #{tpu_custom_call.1} parent=1 // pred_fallthru
      _
    %v70 = vld [vmem:[#allocation2] sm:$0xff]
    %v71 = vxor.u32 %v70, 2147483648
    %v72 = vmul.f32 %v71, 1.442695
    %v73 = vpow.pop %v72
    %v74 = vadd.f32 %v73, 1.0
    %v75 = vrcp.pop %v74
    %v76 = vmul.f32 1.0, %v75
    %v77 = vmul.f32 %v76, 2.0
    %vm78 = vcmp.gt.f32.partialorder %v77, 0.5
    %80 = vrot.lane.b32.xlu0 %v77, 64
    %v81 = vpop.permute.xlu0 %80
    %v83 = vmul.f32 %v70, %v81
    %84 = vrot.lane.b32.xlu0 %v77, 32
    %v85 = vpop.permute.xlu0 %84
    %v87 = vsel %vm78, %v77, %v85
    %89 = vrot.lane.b32.xlu0 %v87, 64
    %v90 = vpop.permute.xlu0 %89
    %v92 = vmul.f32 %v70, %v90
    %93 = vrot.lane.b32.xlu0 %v77, 96
    %v94 = vpop.permute.xlu0 %93
    %v96 = vsel %vm78, %v77, %v94
    %98 = vrot.lane.b32.xlu0 %v96, 64
    %v99 = vpop.permute.xlu0 %98
    %v101 = vmul.f32 %v70, %v99
    %103 = vrot.lane.b32.xlu0 %v101, 32
    %v104 = vpop.permute.xlu0 %103
    %107 = vrot.lane.b32.xlu0 %v83, 64
    %v108 = vpop.permute.xlu0 %107
    %110 = vrot.lane.b32.xlu0 %v83, 96
    %v111 = vpop.permute.xlu0 %110
    %vm113 = vcmask 261120
    %v114 = vsel %vm113, %v92, %v104
    %vm115 = vcmask 523264
    %v116 = vsel %vm115, %v114, %v108
    %vm117 = vcmask 785408
    %v118 = vsel %vm117, %v116, %v111
    %v119 = vld [vmem:[#allocation4] sm:$0xff]
    %v120 = vld [vmem:[#allocation4 + $0x8] sm:$0xff]
    %v121 = vld [vmem:[#allocation4 + $0x10] sm:$0xff]
    %v122 = vld [vmem:[#allocation4 + $0x18] sm:$0xff]
    %v123 = vld [vmem:[#allocation4 + $0x20] sm:$0xff]
    %v124 = vld [vmem:[#allocation4 + $0x28] sm:$0xff]
    %v125 = vld [vmem:[#allocation4 + $0x30] sm:$0xff]
    %v126 = vld [vmem:[#allocation4 + $0x38] sm:$0xff]
    %v127 = vld [vmem:[#allocation4 + $0x40] sm:$0xff]
    %v128 = vld [vmem:[#allocation4 + $0x48] sm:$0xff]
    %v129 = vld [vmem:[#allocation4 + $0x50] sm:$0xff]
    %v130 = vld [vmem:[#allocation4 + $0x58] sm:$0xff]
    %v131 = vld [vmem:[#allocation4 + $0x60] sm:$0xff]
    %v132 = vld [vmem:[#allocation4 + $0x68] sm:$0xff]
    %v133 = vld [vmem:[#allocation4 + $0x70] sm:$0xff]
    %v134 = vld [vmem:[#allocation4 + $0x78] sm:$0xff]
    %135 = vmatprep.subr.mxu0 0.0
    %136 = vmatpush1.msra.mxu0 %v134
    %137 = vmatprep.subr.mxu0 0.0
    %138 = vmatpush1.msra.mxu0 %v133
    %139 = vmatprep.subr.mxu0 0.0
    %140 = vmatpush1.msra.mxu0 %v132
    %141 = vmatprep.subr.mxu0 0.0
    %142 = vmatpush1.msra.mxu0 %v131
    %143 = vmatprep.subr.mxu0 0.0
    %144 = vmatpush1.msra.mxu0 %v130
    %145 = vmatprep.subr.mxu0 0.0
    %146 = vmatpush1.msra.mxu0 %v129
    %147 = vmatprep.subr.mxu0 0.0
    %148 = vmatpush1.msra.mxu0 %v128
    %149 = vmatprep.subr.mxu0 0.0
    %150 = vmatpush1.msra.mxu0 %v127
    %151 = vmatprep.subr.mxu0 0.0
    %152 = vmatpush1.msra.mxu0 %v126
    %153 = vmatprep.subr.mxu0 0.0
    %154 = vmatpush1.msra.mxu0 %v125
    %155 = vmatprep.subr.mxu0 0.0
    %156 = vmatpush1.msra.mxu0 %v124
    %157 = vmatprep.subr.mxu0 0.0
    %158 = vmatpush1.msra.mxu0 %v123
    %159 = vmatprep.subr.mxu0 0.0
    %160 = vmatpush1.msra.mxu0 %v122
    %161 = vmatprep.subr.mxu0 0.0
    %162 = vmatpush1.msra.mxu0 %v121
    %163 = vmatprep.subr.mxu0 0.0
    %164 = vmatpush1.msra.mxu0 %v120
    %165 = vmatprep.subr.mxu0 0.0
    %166 = vmatpush1.msra.mxu0 %v119
    %167 = vmatprep.subr.mxu0 0.0
    %168 = vmatpush2.msra.mxu0 0.0
    %169 = vmatprep.subr.mxu0 0.0
    %170 = vmatpush2.msra.mxu0 0.0
    %171 = vmatprep.subr.mxu0 0.0
    %172 = vmatpush2.msra.mxu0 0.0
    %173 = vmatprep.subr.mxu0 0.0
    %174 = vmatpush2.msra.mxu0 0.0
    %175 = vmatprep.subr.mxu0 0.0
    %176 = vmatpush2.msra.mxu0 0.0
    %177 = vmatprep.subr.mxu0 0.0
    %178 = vmatpush2.msra.mxu0 0.0
    %179 = vmatprep.subr.mxu0 0.0
    %180 = vmatpush2.msra.mxu0 0.0
    %181 = vmatprep.subr.mxu0 0.0
    %182 = vmatpush2.msra.mxu0 0.0
    %183 = vmatprep.subr.mxu0 0.0
    %184 = vmatpush2.msra.mxu0 0.0
    %185 = vmatprep.subr.mxu0 0.0
    %186 = vmatpush2.msra.mxu0 0.0
    %187 = vmatprep.subr.mxu0 0.0
    %188 = vmatpush2.msra.mxu0 0.0
    %189 = vmatprep.subr.mxu0 0.0
    %190 = vmatpush2.msra.mxu0 0.0
    %191 = vmatprep.subr.mxu0 0.0
    %192 = vmatpush2.msra.mxu0 0.0
    %193 = vmatprep.subr.mxu0 0.0
    %194 = vmatpush2.msra.mxu0 0.0
    %195 = vmatprep.subr.mxu0 0.0
    %196 = vmatpush2.msra.mxu0 0.0
    %197 = vmatprep.subr.mxu0 0.0
    %198 = vmatpush2.msra.mxu0 0.0
    %199 = vmatprep.mubr.f32.mxu0 0.0
    %200 = vmatmul.mubr.f32.gmra.mxu0 %v118
    %v201 = vpop.f32.mrf.mxu0
    %v202 = vadd.f32 0.0, %v201
    %v203 = vpop.f32.mrf.mxu0
    %204 = vdwg.mxu0
    %v205 = vmul.f32 %v118, %v202
    %v206 = vld [vmem:[#allocation6] sm:$0x1]
    %v208 = vlaneseq
    %v209 = vshrl.u32 %v208, 7
    %v210 = vsub.s32 0, %v209
    %v211 = vrot.slane %v206, %v210
    %v213 = vadd.f32 %v205, %v211
    %v214 = vadd.f32 %v213, %v118
    %s215 = scalar_lea.vmem [#allocation4], 128
    %v216 = vld [vmem:[%s215] sm:$0xff]
    %v217 = vld [vmem:[%s215 + $0x8] sm:$0xff]
    %v218 = vld [vmem:[%s215 + $0x10] sm:$0xff]
    %v219 = vld [vmem:[%s215 + $0x18] sm:$0xff]
    %v220 = vld [vmem:[%s215 + $0x20] sm:$0xff]
    %v221 = vld [vmem:[%s215 + $0x28] sm:$0xff]
    %v222 = vld [vmem:[%s215 + $0x30] sm:$0xff]
    %v223 = vld [vmem:[%s215 + $0x38] sm:$0xff]
    %v224 = vld [vmem:[%s215 + $0x40] sm:$0xff]
    %v225 = vld [vmem:[%s215 + $0x48] sm:$0xff]
    %v226 = vld [vmem:[%s215 + $0x50] sm:$0xff]
    %v227 = vld [vmem:[%s215 + $0x58] sm:$0xff]
    %v228 = vld [vmem:[%s215 + $0x60] sm:$0xff]
    %v229 = vld [vmem:[%s215 + $0x68] sm:$0xff]
    %v230 = vld [vmem:[%s215 + $0x70] sm:$0xff]
    %v231 = vld [vmem:[%s215 + $0x78] sm:$0xff]
    %232 = vmatprep.subr.mxu0 0.0
    %233 = vmatpush1.msra.mxu0 %v231
    %234 = vmatprep.subr.mxu0 0.0
    %235 = vmatpush1.msra.mxu0 %v230
    %236 = vmatprep.subr.mxu0 0.0
    %237 = vmatpush1.msra.mxu0 %v229
    %238 = vmatprep.subr.mxu0 0.0
    %239 = vmatpush1.msra.mxu0 %v228
    %240 = vmatprep.subr.mxu0 0.0
    %241 = vmatpush1.msra.mxu0 %v227
    %242 = vmatprep.subr.mxu0 0.0
    %243 = vmatpush1.msra.mxu0 %v226
    %244 = vmatprep.subr.mxu0 0.0
    %245 = vmatpush1.msra.mxu0 %v225
    %246 = vmatprep.subr.mxu0 0.0
    %247 = vmatpush1.msra.mxu0 %v224
    %248 = vmatprep.subr.mxu0 0.0
    %249 = vmatpush1.msra.mxu0 %v223
    %250 = vmatprep.subr.mxu0 0.0
    %251 = vmatpush1.msra.mxu0 %v222
    %252 = vmatprep.subr.mxu0 0.0
    %253 = vmatpush1.msra.mxu0 %v221
    %254 = vmatprep.subr.mxu0 0.0
    %255 = vmatpush1.msra.mxu0 %v220
    %256 = vmatprep.subr.mxu0 0.0
    %257 = vmatpush1.msra.mxu0 %v219
    %258 = vmatprep.subr.mxu0 0.0
    %259 = vmatpush1.msra.mxu0 %v218
    %260 = vmatprep.subr.mxu0 0.0
    %261 = vmatpush1.msra.mxu0 %v217
    %262 = vmatprep.subr.mxu0 0.0
    %263 = vmatpush1.msra.mxu0 %v216
    %264 = vmatprep.subr.mxu0 0.0
    %265 = vmatpush2.msra.mxu0 0.0
    %266 = vmatprep.subr.mxu0 0.0
    %267 = vmatpush2.msra.mxu0 0.0
    %268 = vmatprep.subr.mxu0 0.0
    %269 = vmatpush2.msra.mxu0 0.0
    %270 = vmatprep.subr.mxu0 0.0
    %271 = vmatpush2.msra.mxu0 0.0
    %272 = vmatprep.subr.mxu0 0.0
    %273 = vmatpush2.msra.mxu0 0.0
    %274 = vmatprep.subr.mxu0 0.0
    %275 = vmatpush2.msra.mxu0 0.0
    %276 = vmatprep.subr.mxu0 0.0
    %277 = vmatpush2.msra.mxu0 0.0
    %278 = vmatprep.subr.mxu0 0.0
    %279 = vmatpush2.msra.mxu0 0.0
    %280 = vmatprep.subr.mxu0 0.0
    %281 = vmatpush2.msra.mxu0 0.0
    %282 = vmatprep.subr.mxu0 0.0
    %283 = vmatpush2.msra.mxu0 0.0
    %284 = vmatprep.subr.mxu0 0.0
    %285 = vmatpush2.msra.mxu0 0.0
    %286 = vmatprep.subr.mxu0 0.0
    %287 = vmatpush2.msra.mxu0 0.0
    %288 = vmatprep.subr.mxu0 0.0
    %289 = vmatpush2.msra.mxu0 0.0
    %290 = vmatprep.subr.mxu0 0.0
    %291 = vmatpush2.msra.mxu0 0.0
    %292 = vmatprep.subr.mxu0 0.0
    %293 = vmatpush2.msra.mxu0 0.0
    %294 = vmatprep.subr.mxu0 0.0
    %295 = vmatpush2.msra.mxu0 0.0
    %296 = vmatprep.mubr.f32.mxu0 0.0
    %297 = vmatmul.mubr.f32.gmra.mxu0 %v214
    %v298 = vpop.f32.mrf.mxu0
    %v299 = vadd.f32 0.0, %v298
    %v300 = vpop.f32.mrf.mxu0
    %301 = vdwg.mxu0
    %v302 = vmul.f32 %v118, %v299
    %s303 = scalar_lea.vmem [#allocation6], 1
    %v304 = vld [vmem:[%s303] sm:$0x1]
    %v306 = vlaneseq
    %v307 = vshrl.u32 %v306, 7
    %v308 = vsub.s32 0, %v307
    %v309 = vrot.slane %v304, %v308
    %v311 = vadd.f32 %v302, %v309
    %v312 = vadd.f32 %v311, %v214
    %s313 = scalar_lea.vmem [#allocation4], 256
    %v314 = vld [vmem:[%s313] sm:$0xff]
    %v315 = vld [vmem:[%s313 + $0x8] sm:$0xff]
    %v316 = vld [vmem:[%s313 + $0x10] sm:$0xff]
    %v317 = vld [vmem:[%s313 + $0x18] sm:$0xff]
    %v318 = vld [vmem:[%s313 + $0x20] sm:$0xff]
    %v319 = vld [vmem:[%s313 + $0x28] sm:$0xff]
    %v320 = vld [vmem:[%s313 + $0x30] sm:$0xff]
    %v321 = vld [vmem:[%s313 + $0x38] sm:$0xff]
    %v322 = vld [vmem:[%s313 + $0x40] sm:$0xff]
    %v323 = vld [vmem:[%s313 + $0x48] sm:$0xff]
    %v324 = vld [vmem:[%s313 + $0x50] sm:$0xff]
    %v325 = vld [vmem:[%s313 + $0x58] sm:$0xff]
    %v326 = vld [vmem:[%s313 + $0x60] sm:$0xff]
    %v327 = vld [vmem:[%s313 + $0x68] sm:$0xff]
    %v328 = vld [vmem:[%s313 + $0x70] sm:$0xff]
    %v329 = vld [vmem:[%s313 + $0x78] sm:$0xff]
    %s330 = scalar_lea.vmem [#allocation6], 2
    %v331 = vld [vmem:[%s330] sm:$0x1]
    %v333 = vlaneseq
    %v334 = vshrl.u32 %v333, 7
    %v335 = vsub.s32 0, %v334
    %v336 = vrot.slane %v331, %v335
    %338 = vmatprep.subr.mxu0 0.0
    %339 = vmatpush1.msra.mxu0 %v329
    %340 = vmatprep.subr.mxu0 0.0
    %341 = vmatpush1.msra.mxu0 %v328
    %342 = vmatprep.subr.mxu0 0.0
    %343 = vmatpush1.msra.mxu0 %v327
    %344 = vmatprep.subr.mxu0 0.0
    %345 = vmatpush1.msra.mxu0 %v326
    %346 = vmatprep.subr.mxu0 0.0
    %347 = vmatpush1.msra.mxu0 %v325
    %348 = vmatprep.subr.mxu0 0.0
    %349 = vmatpush1.msra.mxu0 %v324
    %350 = vmatprep.subr.mxu0 0.0
    %351 = vmatpush1.msra.mxu0 %v323
    %352 = vmatprep.subr.mxu0 0.0
    %353 = vmatpush1.msra.mxu0 %v322
    %354 = vmatprep.subr.mxu0 0.0
    %355 = vmatpush1.msra.mxu0 %v321
    %356 = vmatprep.subr.mxu0 0.0
    %357 = vmatpush1.msra.mxu0 %v320
    %358 = vmatprep.subr.mxu0 0.0
    %359 = vmatpush1.msra.mxu0 %v319
    %360 = vmatprep.subr.mxu0 0.0
    %361 = vmatpush1.msra.mxu0 %v318
    %362 = vmatprep.subr.mxu0 0.0
    %363 = vmatpush1.msra.mxu0 %v317
    %364 = vmatprep.subr.mxu0 0.0
    %365 = vmatpush1.msra.mxu0 %v316
    %366 = vmatprep.subr.mxu0 0.0
    %367 = vmatpush1.msra.mxu0 %v315
    %368 = vmatprep.subr.mxu0 0.0
    %369 = vmatpush1.msra.mxu0 %v314
    %370 = vmatprep.subr.mxu0 0.0
    %371 = vmatpush2.msra.mxu0 0.0
    %372 = vmatprep.subr.mxu0 0.0
    %373 = vmatpush2.msra.mxu0 0.0
    %374 = vmatprep.subr.mxu0 0.0
    %375 = vmatpush2.msra.mxu0 0.0
    %376 = vmatprep.subr.mxu0 0.0
    %377 = vmatpush2.msra.mxu0 0.0
    %378 = vmatprep.subr.mxu0 0.0
    %379 = vmatpush2.msra.mxu0 0.0
    %380 = vmatprep.subr.mxu0 0.0
    %381 = vmatpush2.msra.mxu0 0.0
    %382 = vmatprep.subr.mxu0 0.0
    %383 = vmatpush2.msra.mxu0 0.0
    %384 = vmatprep.subr.mxu0 0.0
    %385 = vmatpush2.msra.mxu0 0.0
    %386 = vmatprep.subr.mxu0 0.0
    %387 = vmatpush2.msra.mxu0 0.0
    %388 = vmatprep.subr.mxu0 0.0
    %389 = vmatpush2.msra.mxu0 0.0
    %390 = vmatprep.subr.mxu0 0.0
    %391 = vmatpush2.msra.mxu0 0.0
    %392 = vmatprep.subr.mxu0 0.0
    %393 = vmatpush2.msra.mxu0 0.0
    %394 = vmatprep.subr.mxu0 0.0
    %395 = vmatpush2.msra.mxu0 0.0
    %396 = vmatprep.subr.mxu0 0.0
    %397 = vmatpush2.msra.mxu0 0.0
    %398 = vmatprep.subr.mxu0 0.0
    %399 = vmatpush2.msra.mxu0 0.0
    %400 = vmatprep.subr.mxu0 0.0
    %401 = vmatpush2.msra.mxu0 0.0
    %402 = vmatprep.mubr.f32.mxu0 0.0
    %403 = vmatmul.mubr.f32.gmra.mxu0 %v118
    %v404 = vpop.f32.mrf.mxu0
    %v405 = vadd.f32 %v336, %v404
    %v406 = vpop.f32.mrf.mxu0
    %407 = vdwg.mxu0
    %v408 = vmax.f32 %v405, 0.0
    %s409 = scalar_lea.vmem [#allocation4], 384
    %v410 = vld [vmem:[%s409] sm:$0xff]
    %v411 = vld [vmem:[%s409 + $0x8] sm:$0xff]
    %v412 = vld [vmem:[%s409 + $0x10] sm:$0xff]
    %v413 = vld [vmem:[%s409 + $0x18] sm:$0xff]
    %v414 = vld [vmem:[%s409 + $0x20] sm:$0xff]
    %v415 = vld [vmem:[%s409 + $0x28] sm:$0xff]
    %v416 = vld [vmem:[%s409 + $0x30] sm:$0xff]
    %v417 = vld [vmem:[%s409 + $0x38] sm:$0xff]
    %v418 = vld [vmem:[%s409 + $0x40] sm:$0xff]
    %v419 = vld [vmem:[%s409 + $0x48] sm:$0xff]
    %v420 = vld [vmem:[%s409 + $0x50] sm:$0xff]
    %v421 = vld [vmem:[%s409 + $0x58] sm:$0xff]
    %v422 = vld [vmem:[%s409 + $0x60] sm:$0xff]
    %v423 = vld [vmem:[%s409 + $0x68] sm:$0xff]
    %v424 = vld [vmem:[%s409 + $0x70] sm:$0xff]
    %v425 = vld [vmem:[%s409 + $0x78] sm:$0xff]
    %s426 = scalar_lea.vmem [#allocation6], 3
    %v427 = vld [vmem:[%s426] sm:$0x1]
    %v429 = vlaneseq
    %v430 = vshrl.u32 %v429, 7
    %v431 = vsub.s32 0, %v430
    %v432 = vrot.slane %v427, %v431
    %434 = vmatprep.subr.mxu0 0.0
    %435 = vmatpush1.msra.mxu0 %v425
    %436 = vmatprep.subr.mxu0 0.0
    %437 = vmatpush1.msra.mxu0 %v424
    %438 = vmatprep.subr.mxu0 0.0
    %439 = vmatpush1.msra.mxu0 %v423
    %440 = vmatprep.subr.mxu0 0.0
    %441 = vmatpush1.msra.mxu0 %v422
    %442 = vmatprep.subr.mxu0 0.0
    %443 = vmatpush1.msra.mxu0 %v421
    %444 = vmatprep.subr.mxu0 0.0
    %445 = vmatpush1.msra.mxu0 %v420
    %446 = vmatprep.subr.mxu0 0.0
    %447 = vmatpush1.msra.mxu0 %v419
    %448 = vmatprep.subr.mxu0 0.0
    %449 = vmatpush1.msra.mxu0 %v418
    %450 = vmatprep.subr.mxu0 0.0
    %451 = vmatpush1.msra.mxu0 %v417
    %452 = vmatprep.subr.mxu0 0.0
    %453 = vmatpush1.msra.mxu0 %v416
    %454 = vmatprep.subr.mxu0 0.0
    %455 = vmatpush1.msra.mxu0 %v415
    %456 = vmatprep.subr.mxu0 0.0
    %457 = vmatpush1.msra.mxu0 %v414
    %458 = vmatprep.subr.mxu0 0.0
    %459 = vmatpush1.msra.mxu0 %v413
    %460 = vmatprep.subr.mxu0 0.0
    %461 = vmatpush1.msra.mxu0 %v412
    %462 = vmatprep.subr.mxu0 0.0
    %463 = vmatpush1.msra.mxu0 %v411
    %464 = vmatprep.subr.mxu0 0.0
    %465 = vmatpush1.msra.mxu0 %v410
    %466 = vmatprep.subr.mxu0 0.0
    %467 = vmatpush2.msra.mxu0 0.0
    %468 = vmatprep.subr.mxu0 0.0
    %469 = vmatpush2.msra.mxu0 0.0
    %470 = vmatprep.subr.mxu0 0.0
    %471 = vmatpush2.msra.mxu0 0.0
    %472 = vmatprep.subr.mxu0 0.0
    %473 = vmatpush2.msra.mxu0 0.0
    %474 = vmatprep.subr.mxu0 0.0
    %475 = vmatpush2.msra.mxu0 0.0
    %476 = vmatprep.subr.mxu0 0.0
    %477 = vmatpush2.msra.mxu0 0.0
    %478 = vmatprep.subr.mxu0 0.0
    %479 = vmatpush2.msra.mxu0 0.0
    %480 = vmatprep.subr.mxu0 0.0
    %481 = vmatpush2.msra.mxu0 0.0
    %482 = vmatprep.subr.mxu0 0.0
    %483 = vmatpush2.msra.mxu0 0.0
    %484 = vmatprep.subr.mxu0 0.0
    %485 = vmatpush2.msra.mxu0 0.0
    %486 = vmatprep.subr.mxu0 0.0
    %487 = vmatpush2.msra.mxu0 0.0
    %488 = vmatprep.subr.mxu0 0.0
    %489 = vmatpush2.msra.mxu0 0.0
    %490 = vmatprep.subr.mxu0 0.0
    %491 = vmatpush2.msra.mxu0 0.0
    %492 = vmatprep.subr.mxu0 0.0
    %493 = vmatpush2.msra.mxu0 0.0
    %494 = vmatprep.subr.mxu0 0.0
    %495 = vmatpush2.msra.mxu0 0.0
    %496 = vmatprep.subr.mxu0 0.0
    %497 = vmatpush2.msra.mxu0 0.0
    %498 = vmatprep.mubr.f32.mxu0 0.0
    %499 = vmatmul.mubr.f32.gmra.mxu0 %v408
    %v500 = vpop.f32.mrf.mxu0
    %v501 = vadd.f32 %v432, %v500
    %v502 = vpop.f32.mrf.mxu0
    %503 = vdwg.mxu0
    %v504 = vmax.f32 %v501, 0.0
    %v505 = vld [vmem:[#allocation7] sm:$0xff]
    %v506 = vld [vmem:[#allocation7 + $0x8] sm:$0xff]
    %v507 = vld [vmem:[#allocation7 + $0x10] sm:$0xff]
    %v508 = vld [vmem:[#allocation7 + $0x18] sm:$0xff]
    %v509 = vld [vmem:[#allocation7 + $0x20] sm:$0xff]
    %v510 = vld [vmem:[#allocation7 + $0x28] sm:$0xff]
    %v511 = vld [vmem:[#allocation7 + $0x30] sm:$0xff]
    %v512 = vld [vmem:[#allocation7 + $0x38] sm:$0xff]
    %v513 = vld [vmem:[#allocation7 + $0x40] sm:$0xff]
    %v514 = vld [vmem:[#allocation7 + $0x48] sm:$0xff]
    %v515 = vld [vmem:[#allocation7 + $0x50] sm:$0xff]
    %v516 = vld [vmem:[#allocation7 + $0x58] sm:$0xff]
    %v517 = vld [vmem:[#allocation7 + $0x60] sm:$0xff]
    %v518 = vld [vmem:[#allocation7 + $0x68] sm:$0xff]
    %v519 = vld [vmem:[#allocation7 + $0x70] sm:$0xff]
    %v520 = vld [vmem:[#allocation7 + $0x78] sm:$0xff]
    %s521 = scalar_lea.vmem [#allocation7], 128
    %v522 = vld [vmem:[%s521] sm:$0xff]
    %v523 = vld [vmem:[%s521 + $0x8] sm:$0xff]
    %v524 = vld [vmem:[%s521 + $0x10] sm:$0xff]
    %v525 = vld [vmem:[%s521 + $0x18] sm:$0xff]
    %v526 = vld [vmem:[%s521 + $0x20] sm:$0xff]
    %v527 = vld [vmem:[%s521 + $0x28] sm:$0xff]
    %v528 = vld [vmem:[%s521 + $0x30] sm:$0xff]
    %v529 = vld [vmem:[%s521 + $0x38] sm:$0xff]
    %v530 = vld [vmem:[%s521 + $0x40] sm:$0xff]
    %v531 = vld [vmem:[%s521 + $0x48] sm:$0xff]
    %v532 = vld [vmem:[%s521 + $0x50] sm:$0xff]
    %v533 = vld [vmem:[%s521 + $0x58] sm:$0xff]
    %v534 = vld [vmem:[%s521 + $0x60] sm:$0xff]
    %v535 = vld [vmem:[%s521 + $0x68] sm:$0xff]
    %v536 = vld [vmem:[%s521 + $0x70] sm:$0xff]
    %v537 = vld [vmem:[%s521 + $0x78] sm:$0xff]
    %538 = vmatprep.subr.mxu0 0.0
    %539 = vmatpush1.msra.mxu0 %v537
    %540 = vmatprep.subr.mxu0 0.0
    %541 = vmatpush1.msra.mxu0 %v536
    %542 = vmatprep.subr.mxu0 0.0
    %543 = vmatpush1.msra.mxu0 %v535
    %544 = vmatprep.subr.mxu0 0.0
    %545 = vmatpush1.msra.mxu0 %v534
    %546 = vmatprep.subr.mxu0 0.0
    %547 = vmatpush1.msra.mxu0 %v533
    %548 = vmatprep.subr.mxu0 0.0
    %549 = vmatpush1.msra.mxu0 %v532
    %550 = vmatprep.subr.mxu0 0.0
    %551 = vmatpush1.msra.mxu0 %v531
    %552 = vmatprep.subr.mxu0 0.0
    %553 = vmatpush1.msra.mxu0 %v530
    %554 = vmatprep.subr.mxu0 0.0
    %555 = vmatpush1.msra.mxu0 %v529
    %556 = vmatprep.subr.mxu0 0.0
    %557 = vmatpush1.msra.mxu0 %v528
    %558 = vmatprep.subr.mxu0 0.0
    %559 = vmatpush1.msra.mxu0 %v527
    %560 = vmatprep.subr.mxu0 0.0
    %561 = vmatpush1.msra.mxu0 %v526
    %562 = vmatprep.subr.mxu0 0.0
    %563 = vmatpush1.msra.mxu0 %v525
    %564 = vmatprep.subr.mxu0 0.0
    %565 = vmatpush1.msra.mxu0 %v524
    %566 = vmatprep.subr.mxu0 0.0
    %567 = vmatpush1.msra.mxu0 %v523
    %568 = vmatprep.subr.mxu0 0.0
    %569 = vmatpush1.msra.mxu0 %v522
    %570 = vmatprep.subr.mxu0 0.0
    %571 = vmatpush2.msra.mxu0 0.0
    %572 = vmatprep.subr.mxu0 0.0
    %573 = vmatpush2.msra.mxu0 0.0
    %574 = vmatprep.subr.mxu0 0.0
    %575 = vmatpush2.msra.mxu0 0.0
    %576 = vmatprep.subr.mxu0 0.0
    %577 = vmatpush2.msra.mxu0 0.0
    %578 = vmatprep.subr.mxu0 0.0
    %579 = vmatpush2.msra.mxu0 0.0
    %580 = vmatprep.subr.mxu0 0.0
    %581 = vmatpush2.msra.mxu0 0.0
    %582 = vmatprep.subr.mxu0 0.0
    %583 = vmatpush2.msra.mxu0 0.0
    %584 = vmatprep.subr.mxu0 0.0
    %585 = vmatpush2.msra.mxu0 0.0
    %586 = vmatprep.subr.mxu0 0.0
    %587 = vmatpush2.msra.mxu0 0.0
    %588 = vmatprep.subr.mxu0 0.0
    %589 = vmatpush2.msra.mxu0 0.0
    %590 = vmatprep.subr.mxu0 0.0
    %591 = vmatpush2.msra.mxu0 0.0
    %592 = vmatprep.subr.mxu0 0.0
    %593 = vmatpush2.msra.mxu0 0.0
    %594 = vmatprep.subr.mxu0 0.0
    %595 = vmatpush2.msra.mxu0 0.0
    %596 = vmatprep.subr.mxu0 0.0
    %597 = vmatpush2.msra.mxu0 0.0
    %598 = vmatprep.subr.mxu0 0.0
    %599 = vmatpush2.msra.mxu0 0.0
    %600 = vmatprep.subr.mxu0 0.0
    %601 = vmatpush2.msra.mxu0 0.0
    %602 = vmatprep.mubr.f32.mxu0 0.0
    %603 = vmatmul.mubr.f32.gmra.mxu0 %v504
    %v604 = vpop.f32.mrf.mxu0
    %v605 = vadd.f32 0.0, %v604
    %v606 = vpop.f32.mrf.mxu0
    %607 = vdwg.mxu0
    %608 = vmatprep.subr.mxu0 0.0
    %609 = vmatpush1.msra.mxu0 %v520
    %610 = vmatprep.subr.mxu0 0.0
    %611 = vmatpush1.msra.mxu0 %v519
    %612 = vmatprep.subr.mxu0 0.0
    %613 = vmatpush1.msra.mxu0 %v518
    %614 = vmatprep.subr.mxu0 0.0
    %615 = vmatpush1.msra.mxu0 %v517
    %616 = vmatprep.subr.mxu0 0.0
    %617 = vmatpush1.msra.mxu0 %v516
    %618 = vmatprep.subr.mxu0 0.0
    %619 = vmatpush1.msra.mxu0 %v515
    %620 = vmatprep.subr.mxu0 0.0
    %621 = vmatpush1.msra.mxu0 %v514
    %622 = vmatprep.subr.mxu0 0.0
    %623 = vmatpush1.msra.mxu0 %v513
    %624 = vmatprep.subr.mxu0 0.0
    %625 = vmatpush1.msra.mxu0 %v512
    %626 = vmatprep.subr.mxu0 0.0
    %627 = vmatpush1.msra.mxu0 %v511
    %628 = vmatprep.subr.mxu0 0.0
    %629 = vmatpush1.msra.mxu0 %v510
    %630 = vmatprep.subr.mxu0 0.0
    %631 = vmatpush1.msra.mxu0 %v509
    %632 = vmatprep.subr.mxu0 0.0
    %633 = vmatpush1.msra.mxu0 %v508
    %634 = vmatprep.subr.mxu0 0.0
    %635 = vmatpush1.msra.mxu0 %v507
    %636 = vmatprep.subr.mxu0 0.0
    %637 = vmatpush1.msra.mxu0 %v506
    %638 = vmatprep.subr.mxu0 0.0
    %639 = vmatpush1.msra.mxu0 %v505
    %640 = vmatprep.subr.mxu0 0.0
    %641 = vmatpush2.msra.mxu0 0.0
    %642 = vmatprep.subr.mxu0 0.0
    %643 = vmatpush2.msra.mxu0 0.0
    %644 = vmatprep.subr.mxu0 0.0
    %645 = vmatpush2.msra.mxu0 0.0
    %646 = vmatprep.subr.mxu0 0.0
    %647 = vmatpush2.msra.mxu0 0.0
    %648 = vmatprep.subr.mxu0 0.0
    %649 = vmatpush2.msra.mxu0 0.0
    %650 = vmatprep.subr.mxu0 0.0
    %651 = vmatpush2.msra.mxu0 0.0
    %652 = vmatprep.subr.mxu0 0.0
    %653 = vmatpush2.msra.mxu0 0.0
    %654 = vmatprep.subr.mxu0 0.0
    %655 = vmatpush2.msra.mxu0 0.0
    %656 = vmatprep.subr.mxu0 0.0
    %657 = vmatpush2.msra.mxu0 0.0
    %658 = vmatprep.subr.mxu0 0.0
    %659 = vmatpush2.msra.mxu0 0.0
    %660 = vmatprep.subr.mxu0 0.0
    %661 = vmatpush2.msra.mxu0 0.0
    %662 = vmatprep.subr.mxu0 0.0
    %663 = vmatpush2.msra.mxu0 0.0
    %664 = vmatprep.subr.mxu0 0.0
    %665 = vmatpush2.msra.mxu0 0.0
    %666 = vmatprep.subr.mxu0 0.0
    %667 = vmatpush2.msra.mxu0 0.0
    %668 = vmatprep.subr.mxu0 0.0
    %669 = vmatpush2.msra.mxu0 0.0
    %670 = vmatprep.subr.mxu0 0.0
    %671 = vmatpush2.msra.mxu0 0.0
    %672 = vmatprep.mubr.f32.mxu0 0.0
    %673 = vmatmul.mubr.f32.gmra.mxu0 %v312
    %v674 = vpop.f32.mrf.mxu0
    %v675 = vadd.f32 %v605, %v674
    %v676 = vpop.f32.mrf.mxu0
    %677 = vdwg.mxu0
    %vm678 = vcmask 31744
    %679 = vst.msk [vmem:[%s4] sm:$0xff] %vm678, %v675
    // Predicated region
    $region34: #{tpu_custom_call.1} parent=1 // pred_check
      _
    $region35: #{tpu_custom_call.1} parent=1 // pred_check_branch
      %681 = sbr.rel (0) target = $region37
    $region36: #{tpu_custom_call.1} parent=1 // pred_region
      _
    $region37: #{tpu_custom_call.1} parent=1 // pred_fallthru
      _
    // Predicated region
    $region38: #{tpu_custom_call.1} parent=1 // pred_check
      _
    $region39: #{tpu_custom_call.1} parent=1 // pred_check_branch
      %683 = sbr.rel (0) target = $region41
    $region40: #{tpu_custom_call.1} parent=1 // pred_region
      _
    $region41: #{tpu_custom_call.1} parent=1 // pred_fallthru
      _
    %684 = vsyncpa [#allocation3], 1
    %685 = vsyncpa [#allocation5], 1
    %686 = vsyncpa [#allocation8], 1

</llo_original>
